<compile_context>
chip_gen: v6e
topology: v6e:2x2x1
jax: 0.10.0
libtpu: 0.0.40
codegen_flags: <defaults>
</compile_context>

<pallas_src>
import jax
import jax.numpy as jnp
from jax.experimental import pallas as pl
from jax.experimental.pallas import tpu as pltpu

INPUT_SIZE = 5
OUTPUT_SIZE = 2


def _fc_plus_noise_kernel(x_ref, wb_ref, o_ref, noise_ref):
    """o = x @ W^T + (bias + 1);  noise = 1.  Native (batch-major) layout.

    x_ref:     (TB, IN)      one batch tile of the input
    wb_ref:    (IN + 1, OUT) rows 0..IN-1 = W^T, last row = bias + 1.0
    o_ref:     (TB, OUT)     linear output + noise
    noise_ref: (TB, OUT)     all-ones noise tensor
    """
    x = x_ref[...]                       # (TB, IN)
    wb = wb_ref[...]                     # (IN+1, OUT), one vreg
    w_t = wb[:INPUT_SIZE, :]             # (IN, OUT)
    b_plus_noise = wb[INPUT_SIZE:, :]    # (1, OUT)
    # Single MXU matmul per tile (MXU is otherwise idle; latency hides under DMA).
    y = jnp.dot(x, w_t, preferred_element_type=jnp.float32) + b_plus_noise
    o_ref[...] = y.astype(o_ref.dtype)
    noise_ref[...] = jnp.ones_like(noise_ref)


def _round_up(n, m):
    return ((n + m - 1) // m) * m


def _pick_batch_tile(batch):
    """Pick the batch tile.

    - tiles capped at 4096 rows: double-buffered (in + out + noise) f32 blocks
      occupy ~12 MiB of VMEM, comfortably inside the 32 MiB limit we request
      (and far inside v7x's 64 MiB physical VMEM).
    - batches > 1024 are split into at least two blocks so the "parallel" grid
      axis can shard across both TensorCores on v7x; smaller batches use a
      single block (fewest grid steps -> least fixed per-step overhead, which
      is what dominates this op on single-TC v5e/v6e).
    """
    CAP = 4096
    MIN_SPLIT = 1024
    if batch <= MIN_SPLIT:
        return _round_up(batch, 8)
    return min(CAP, _round_up(pl.cdiv(batch, 2), 8))


def model_forward(x, weight, bias):
    """Pallas equivalent of Model.forward.

    Args:
      x:      (B, INPUT_SIZE)  float32
      weight: (OUTPUT_SIZE, INPUT_SIZE) float32  (native PyTorch Linear layout)
      bias:   (OUTPUT_SIZE,) float32
    Returns:
      (output, {'image': {'output': output, 'noise': noise}, 'scalar': noise.sum()})
    """
    batch = x.shape[0]
    tb = _pick_batch_tile(batch)
    n_blocks = pl.cdiv(batch, tb)

    # Tiny (48-byte) parameter prep: pack W^T and (bias + 1) into one array so
    # the kernel has exactly one constant-index parameter input.
    wb = jnp.concatenate(
        [weight.T.astype(jnp.float32),
         (bias.astype(jnp.float32) + 1.0).reshape(1, OUTPUT_SIZE)],
        axis=0)                                            # (IN+1, OUT)

    output, noise = pl.pallas_call(
        _fc_plus_noise_kernel,
        out_shape=(
            jax.ShapeDtypeStruct((batch, OUTPUT_SIZE), jnp.float32),
            jax.ShapeDtypeStruct((batch, OUTPUT_SIZE), jnp.float32),
        ),
        grid=(n_blocks,),
        in_specs=[
            pl.BlockSpec((tb, INPUT_SIZE), lambda i: (i, 0)),
            pl.BlockSpec((INPUT_SIZE + 1, OUTPUT_SIZE), lambda i: (0, 0)),
        ],
        out_specs=(
            pl.BlockSpec((tb, OUTPUT_SIZE), lambda i: (i, 0)),
            pl.BlockSpec((tb, OUTPUT_SIZE), lambda i: (i, 0)),
        ),
        compiler_params=pltpu.CompilerParams(
            dimension_semantics=("parallel",),
            vmem_limit_bytes=32 * 1024 * 1024),
    )(x, wb)

    # noise.sum() is a compile-time constant: B * OUTPUT_SIZE.
    scalar = jnp.asarray(batch * OUTPUT_SIZE, dtype=jnp.float32)
    # TODO(synk): the PyTorch forward's print() of device/size info is host-side
    # logging with no Pallas equivalent; omitted.
    return output, {"image": {"output": output, "noise": noise},
                    "scalar": scalar}


if __name__ == "__main__":
    key = jax.random.PRNGKey(0)
    k_x, k_w, k_b, k_x2 = jax.random.split(key, 4)

    # PyTorch-style Linear init: uniform(-1/sqrt(in), 1/sqrt(in))
    bound = 1.0 / (INPUT_SIZE ** 0.5)
    weight = jax.random.uniform(k_w, (OUTPUT_SIZE, INPUT_SIZE),
                                minval=-bound, maxval=bound, dtype=jnp.float32)
    bias = jax.random.uniform(k_b, (OUTPUT_SIZE,),
                              minval=-bound, maxval=bound, dtype=jnp.float32)

    # Small batch (matches the tutorial's scale): single-block path.
    B = 8
    x = jax.random.normal(k_x, (B, INPUT_SIZE), dtype=jnp.float32)
    output, extras = model_forward(x, weight, bias)
    jax.block_until_ready(output)
    jax.block_until_ready(extras["scalar"])

    ref = x @ weight.T + bias + 1.0
    assert jnp.allclose(output, ref, atol=1e-5), "small-batch mismatch vs reference"
    assert float(extras["scalar"]) == B * OUTPUT_SIZE
    assert bool(jnp.all(extras["image"]["noise"] == 1.0))
    assert extras["image"]["noise"].shape == (B, OUTPUT_SIZE)

    # Larger batch exercises the tiled (grid >= 2, both-TC on v7x) path.
    B2 = 2048
    x2 = jax.random.normal(k_x2, (B2, INPUT_SIZE), dtype=jnp.float32)
    output2, extras2 = model_forward(x2, weight, bias)
    jax.block_until_ready(output2)
    ref2 = x2 @ weight.T + bias + 1.0
    assert jnp.allclose(output2, ref2, atol=1e-5), "tiled-batch mismatch vs reference"
    assert float(extras2["scalar"]) == B2 * OUTPUT_SIZE
    assert bool(jnp.all(extras2["image"]["noise"] == 1.0))

    print("KERNEL_OK")
</pallas_src>

<mosaic_0001>
module attributes {stable_mosaic.version = 11 : i64} {
  func.func @_fc_plus_noise_kernel(%arg0: i32, %arg1: memref<8x5xf32, #tpu.memory_space<vmem>>, %arg2: memref<6x2xf32, #tpu.memory_space<vmem>>, %arg3: memref<8x2xf32, #tpu.memory_space<vmem>>, %arg4: memref<8x2xf32, #tpu.memory_space<vmem>>) attributes {dimension_semantics = [#tpu.dimension_semantics<parallel>], iteration_bounds = array<i64: 1>, scalar_prefetch = 0 : i64, scratch_operands = 0 : i64, tpu.core_type = #tpu.core_type<tc>, window_params = [{transform_indices = @transform_0, window_bounds = array<i64: 8, 5>}, {pipeline_mode = #tpu.pipeline_mode<synchronous>, transform_indices = @transform_1, window_bounds = array<i64: 6, 2>}, {transform_indices = @transform_2, window_bounds = array<i64: 8, 2>}, {transform_indices = @transform_3, window_bounds = array<i64: 8, 2>}]} {
    %c0 = arith.constant 0 : index
    %c0_0 = arith.constant 0 : index
    %0 = vector.load %arg1[%c0, %c0_0] : memref<8x5xf32, #tpu.memory_space<vmem>>, vector<8x5xf32>
    %c0_1 = arith.constant 0 : index
    %c0_2 = arith.constant 0 : index
    %1 = vector.load %arg2[%c0_1, %c0_2] : memref<6x2xf32, #tpu.memory_space<vmem>>, vector<6x2xf32>
    %2 = vector.extract_strided_slice %1 {offsets = [0, 0], sizes = [5, 2], strides = [1, 1]} : vector<6x2xf32> to vector<5x2xf32>
    %3 = vector.extract_strided_slice %1 {offsets = [5, 0], sizes = [1, 2], strides = [1, 1]} : vector<6x2xf32> to vector<1x2xf32>
    %cst = arith.constant dense<0.000000e+00> : vector<8x2xf32>
    %4 = tpu.matmul %0, %2, %cst {dimension_numbers = #tpu.dot_dimension_numbers<[1], [0], [0], [1], [0, 0, 1, 1], [], []>} : vector<8x5xf32>, vector<5x2xf32>, vector<8x2xf32> -> vector<8x2xf32>
    %5 = vector.broadcast %3 : vector<1x2xf32> to vector<8x2xf32>
    %6 = arith.addf %4, %5 : vector<8x2xf32>
    %c0_3 = arith.constant 0 : index
    %c0_4 = arith.constant 0 : index
    %7 = vector.load %arg3[%c0_3, %c0_4] : memref<8x2xf32, #tpu.memory_space<vmem>>, vector<8x2xf32>
    tpu.vector_store %arg3[%c0_3, %c0_4], %6 {strides = array<i32>} : memref<8x2xf32, #tpu.memory_space<vmem>>, vector<8x2xf32>,
    %cst_5 = arith.constant 1.000000e+00 : f32
    %8 = vector.broadcast %cst_5 : f32 to vector<8x2xf32>
    %c0_6 = arith.constant 0 : index
    %c0_7 = arith.constant 0 : index
    %9 = vector.load %arg4[%c0_6, %c0_7] : memref<8x2xf32, #tpu.memory_space<vmem>>, vector<8x2xf32>
    tpu.vector_store %arg4[%c0_6, %c0_7], %8 {strides = array<i32>} : memref<8x2xf32, #tpu.memory_space<vmem>>, vector<8x2xf32>,
    return
  }
  func.func @transform_0(%arg0: i32) -> (i32, i32) {
    %c0_i32 = arith.constant 0 : i32
    %c0_i32_0 = arith.constant 0 : i32
    return %arg0, %c0_i32 : i32, i32
  }
  func.func @transform_1(%arg0: i32) -> (i32, i32) {
    %c0_i32 = arith.constant 0 : i32
    %c0_i32_0 = arith.constant 0 : i32
    %c0_i32_1 = arith.constant 0 : i32
    return %c0_i32, %c0_i32_0 : i32, i32
  }
  func.func @transform_2(%arg0: i32) -> (i32, i32) {
    %c0_i32 = arith.constant 0 : i32
    %c0_i32_0 = arith.constant 0 : i32
    return %arg0, %c0_i32 : i32, i32
  }
  func.func @transform_3(%arg0: i32) -> (i32, i32) {
    %c0_i32 = arith.constant 0 : i32
    %c0_i32_0 = arith.constant 0 : i32
    return %arg0, %c0_i32 : i32, i32
  }
}

</mosaic_0001>

<llo_original>
// kernel: tpu_custom_call.1
$region0: #{tpu_custom_call.1}
  #allocation0 [shape = 'u32[]', space=smem, size = 0x4, offset = 0x4, fixed_abs, tag = 'smem constant byte address 0x4 - core index']
  #allocation1 [shape = 'u32[144,128]{1,0:T(1,128)}', space=vmem, size = 0x12000, scoped, tag = 'internal scratch']
  %s0 = inlined_call_operand.vmem [shape: f32[8,5], index: 0, kind: input, shape index: {}]
  %s1 = inlined_call_operand.vmem [shape: f32[6,2], index: 1, kind: input, shape index: {}]
  %s2 = inlined_call_operand.vmem [shape: f32[8,2], index: 2, kind: output, shape index: {0}]
  %s3 = inlined_call_operand.vmem [shape: f32[8,2], index: 3, kind: output, shape index: {1}]
  %4 = xla_tuple %s2, %s3
  %s5 = sld [smem:[#allocation0]]
  $region26: #{tpu_custom_call.1} parent=0
    _
  %s7 = ssub.s32 1, %s5
  %s8 = scalar_select 0, %s7, %s5
  // Predicated region
  $region2: #{tpu_custom_call.1} parent=0 // pred_check
    _
  $region3: #{tpu_custom_call.1} parent=0 // pred_check_branch
    %10 = sbr.rel (0) target = $region5
  $region4: #{tpu_custom_call.1} parent=0 // pred_region
    _
  $region5: #{tpu_custom_call.1} parent=0 // pred_fallthru
    _
  // Predicated region
  $region6: #{tpu_custom_call.1} parent=0 // pred_check
    _
  $region7: #{tpu_custom_call.1} parent=0 // pred_check_branch
    %12 = sbr.rel (0) target = $region9
  $region8: #{tpu_custom_call.1} parent=0 // pred_region
    _
  $region9: #{tpu_custom_call.1} parent=0 // pred_fallthru
    _
  %v13 = vld [vmem:[%s0] sm:$0xff]
  %v14 = vld [vmem:[%s1] sm:$0x3f]
  %v15 = vlaneseq
  %v16 = vshrl.u32 %v15, 7
  %v17 = vsub.s32 5, %v16
  %v18 = vrot.slane %v14, %v17
  %vm19 = vcmask 39936
  %v21 = vsel %vm19, %v13, 0
  %vm23 = vcmask 1044480
  %v25 = vsel %vm23, %v14, 0
  %27 = vmatprep.subr.mxu0 0.0
  %28 = vmatpush1.msra.mxu0 0.0
  %29 = vmatprep.subr.mxu0 0.0
  %30 = vmatpush1.msra.mxu0 0.0
  %31 = vmatprep.subr.mxu0 0.0
  %32 = vmatpush1.msra.mxu0 0.0
  %33 = vmatprep.subr.mxu0 0.0
  %34 = vmatpush1.msra.mxu0 0.0
  %35 = vmatprep.subr.mxu0 0.0
  %36 = vmatpush1.msra.mxu0 0.0
  %37 = vmatprep.subr.mxu0 0.0
  %38 = vmatpush1.msra.mxu0 0.0
  %39 = vmatprep.subr.mxu0 0.0
  %40 = vmatpush1.msra.mxu0 0.0
  %41 = vmatprep.subr.mxu0 0.0
  %42 = vmatpush1.msra.mxu0 0.0
  %43 = vmatprep.subr.mxu0 0.0
  %44 = vmatpush1.msra.mxu0 0.0
  %45 = vmatprep.subr.mxu0 0.0
  %46 = vmatpush1.msra.mxu0 0.0
  %47 = vmatprep.subr.mxu0 0.0
  %48 = vmatpush1.msra.mxu0 0.0
  %49 = vmatprep.subr.mxu0 0.0
  %50 = vmatpush1.msra.mxu0 0.0
  %51 = vmatprep.subr.mxu0 0.0
  %52 = vmatpush1.msra.mxu0 0.0
  %53 = vmatprep.subr.mxu0 0.0
  %54 = vmatpush1.msra.mxu0 0.0
  %55 = vmatprep.subr.mxu0 0.0
  %56 = vmatpush1.msra.mxu0 0.0
  %57 = vmatprep.subr.mxu0 0.0
  %58 = vmatpush1.msra.mxu0 %v25
  %59 = vmatprep.subr.mxu0 0.0
  %60 = vmatpush2.msra.mxu0 0.0
  %61 = vmatprep.subr.mxu0 0.0
  %62 = vmatpush2.msra.mxu0 0.0
  %63 = vmatprep.subr.mxu0 0.0
  %64 = vmatpush2.msra.mxu0 0.0
  %65 = vmatprep.subr.mxu0 0.0
  %66 = vmatpush2.msra.mxu0 0.0
  %67 = vmatprep.subr.mxu0 0.0
  %68 = vmatpush2.msra.mxu0 0.0
  %69 = vmatprep.subr.mxu0 0.0
  %70 = vmatpush2.msra.mxu0 0.0
  %71 = vmatprep.subr.mxu0 0.0
  %72 = vmatpush2.msra.mxu0 0.0
  %73 = vmatprep.subr.mxu0 0.0
  %74 = vmatpush2.msra.mxu0 0.0
  %75 = vmatprep.subr.mxu0 0.0
  %76 = vmatpush2.msra.mxu0 0.0
  %77 = vmatprep.subr.mxu0 0.0
  %78 = vmatpush2.msra.mxu0 0.0
  %79 = vmatprep.subr.mxu0 0.0
  %80 = vmatpush2.msra.mxu0 0.0
  %81 = vmatprep.subr.mxu0 0.0
  %82 = vmatpush2.msra.mxu0 0.0
  %83 = vmatprep.subr.mxu0 0.0
  %84 = vmatpush2.msra.mxu0 0.0
  %85 = vmatprep.subr.mxu0 0.0
  %86 = vmatpush2.msra.mxu0 0.0
  %87 = vmatprep.subr.mxu0 0.0
  %88 = vmatpush2.msra.mxu0 0.0
  %89 = vmatprep.subr.mxu0 0.0
  %90 = vmatpush2.msra.mxu0 0.0
  %91 = vmatprep.mubr.f32.mxu0 0.0
  %92 = vmatmul.mubr.f32.gmra.mxu0 %v21
  %v93 = vpop.f32.mrf.mxu0
  %v94 = vadd.f32 %v18, %v93
  %v95 = vpop.f32.mrf.mxu0
  %96 = vdwg.mxu0
  %vm97 = vcmask 15360
  %98 = vst.msk [vmem:[%s2] sm:$0xff] %vm97, %v94
  %99 = vst.msk [vmem:[%s3] sm:$0xff] %vm97, 1.0
  // Predicated region
  $region10: #{tpu_custom_call.1} parent=0 // pred_check
    _
  $region11: #{tpu_custom_call.1} parent=0 // pred_check_branch
    %101 = sbr.rel (0) target = $region13
  $region12: #{tpu_custom_call.1} parent=0 // pred_region
    _
  $region13: #{tpu_custom_call.1} parent=0 // pred_fallthru
    _
  // Predicated region
  $region14: #{tpu_custom_call.1} parent=0 // pred_check
    _
  $region15: #{tpu_custom_call.1} parent=0 // pred_check_branch
    %103 = sbr.rel (0) target = $region17
  $region16: #{tpu_custom_call.1} parent=0 // pred_region
    _
  $region17: #{tpu_custom_call.1} parent=0 // pred_fallthru
    _
  // Predicated region
  $region18: #{tpu_custom_call.1} parent=0 // pred_check
    _
  $region19: #{tpu_custom_call.1} parent=0 // pred_check_branch
    %105 = sbr.rel (0) target = $region21
  $region20: #{tpu_custom_call.1} parent=0 // pred_region
    _
  $region21: #{tpu_custom_call.1} parent=0 // pred_fallthru
    _
  // Predicated region
  $region22: #{tpu_custom_call.1} parent=0 // pred_check
    _
  $region23: #{tpu_custom_call.1} parent=0 // pred_check_branch
    %107 = sbr.rel (0) target = $region25
  $region24: #{tpu_custom_call.1} parent=0 // pred_region
    _
  $region25: #{tpu_custom_call.1} parent=0 // pred_fallthru
    _

</llo_original>
